<compile_context>
chip_gen: v6e
topology: v6e:2x2x1
jax: 0.10.0
libtpu: 0.0.40
codegen_flags: <defaults>
</compile_context>

<pallas_src>
import functools

import jax
import jax.numpy as jnp
import numpy as np
from jax import lax
from jax.experimental import pallas as pl
from jax.experimental.pallas import tpu as pltpu

# Fixed filters from SmoothLoss.__init__ (constants, not learned weights).
KX = ((-1.0, 0.0, 1.0), (-2.0, 0.0, 2.0), (-1.0, 0.0, 1.0))
KY = ((-1.0, -2.0, -1.0), (0.0, 0.0, 2.0), (1.0, 0.0, 1.0))


def _round_up(x, m):
    return -(-x // m) * m


def _colsum(a):
    """(bb, H, W) -> (1, W): two axis-0 reductions, no (bb*H, W) reshape."""
    return jnp.sum(jnp.sum(a, axis=0), axis=0, keepdims=True)


def _disp_grad_mags(d):
    """|conv(d, KX)|, |conv(d, KY)| ('same', zero pad) -> (N, 2, H, W) f32.

    Tiny (N*H*W) plain-JAX precompute so the kernel does not redo the disparity
    convolution on every L*R grid step.
    """
    n, h, w = d.shape
    dp = jnp.pad(d, ((0, 0), (1, 1), (1, 1)))

    def conv(k):
        out = jnp.zeros_like(d)
        for di in range(3):
            for dj in range(3):
                kk = k[di][dj]
                if kk != 0.0:
                    out = out + kk * dp[:, di:di + h, dj:dj + w]
        return out

    return jnp.stack([jnp.abs(conv(KX)), jnp.abs(conv(KY))], axis=1)


def _smooth_kernel(g_ref, img_ref, out_ref, *, bb, LR, masked, use_roll):
    C, H, W = img_ref.shape[1], img_ref.shape[2], img_ref.shape[3]

    if use_roll:
        # Rolls run on the (otherwise idle) XLU slot; a hoisted boundary mask
        # per direction zeroes the wrapped row/column (zero-padded "same" conv).
        col = lax.broadcasted_iota(jnp.int32, (1, H, W), 2)
        row = lax.broadcasted_iota(jnp.int32, (1, H, W), 1)
        keep = {(+1, 2): col < (W - 1), (-1, 2): col > 0,
                (+1, 1): row < (H - 1), (-1, 1): row > 0}

        def shift(x, d, axis):
            # result[..., i, ...] = x[..., i + d, ...] with zero fill, d in {-1,+1}
            n = x.shape[axis]
            return jnp.where(keep[(d, axis)], pltpu.roll(x, (-d) % n, axis), 0.0)
    else:
        # Portability fallback: concatenate-based shifts (materialize copies).
        def shift(x, d, axis):
            n = x.shape[axis]
            zshape = list(x.shape)
            zshape[axis] = 1
            z = jnp.zeros(zshape, x.dtype)
            if d == 1:
                return jnp.concatenate(
                    [lax.slice_in_dim(x, 1, n, axis=axis), z], axis=axis)
            return jnp.concatenate(
                [z, lax.slice_in_dim(x, 0, n - 1, axis=axis)], axis=axis)

    if masked:
        # Last block along L*R may over-read; zero those slices BEFORE any
        # square/sum so garbage never reaches a reduction.
        j = pl.program_id(1)
        r = lax.broadcasted_iota(jnp.int32, (bb, 1), 0)
        valid = ((j * bb + r) < LR)[:, :, None]            # (bb, 1, 1)

    # conv2d(img, K.repeat(1,3,1,1)) followed by the mean over its single output
    # channel == the same 3x3 conv applied to the channel-summed image.
    # Native-dtype load (bf16 stays bf16 in HBM/VMEM); math is f32 in-vreg.
    sp = img_ref[:, 0, :, :].astype(jnp.float32)
    for c in range(1, C):
        sp = sp + img_ref[:, c, :, :].astype(jnp.float32)

    xm1 = shift(sp, -1, 2)                                 # sp[..., j-1]
    xp1 = shift(sp, +1, 2)                                 # sp[..., j+1]

    # ---- X direction (finished before Y: halves peak live temporaries) ------
    # KX is separable: [1,2,1]^T x [-1,0,1]
    hx = xp1 - xm1
    gix = shift(hx, -1, 1) + 2.0 * hx + shift(hx, +1, 1)
    # TODO(synk): if a bundle dump shows EUP-bound on v6e/v7x, evaluate exp in
    # bf16 there (EUP has bf16 on those gens) after an accuracy check.
    gx = g_ref[0] * jnp.exp(-jnp.abs(gix))                 # |ddisp/dx| * exp(-|dimg/dx|)
    if masked:
        gx = jnp.where(valid, gx, 0.0)
    out_ref[0:1, :] = _colsum(gx)
    out_ref[1:2, :] = _colsum(gx * gx)

    # ---- Y direction: KY = [[-1,-2,-1],[0,0,2],[1,0,1]] (row-wise combine) --
    a = -(xm1 + 2.0 * sp + xp1)                            # taps applied at row i-1
    c2 = xm1 + xp1                                         # taps applied at row i+1
    giy = shift(a, -1, 1) + 2.0 * xp1 + shift(c2, +1, 1)
    gy = g_ref[1] * jnp.exp(-jnp.abs(giy))
    if masked:
        gy = jnp.where(valid, gy, 0.0)
    out_ref[2:3, :] = _colsum(gy)
    out_ref[3:4, :] = _colsum(gy * gy)


def smooth_loss(decomposition, disp, *, block_lr=None, vmem_limit_bytes=None,
                use_roll=None):
    """Equivalent of SmoothLoss.forward(decomposition, disp)."""
    N, L, R, C, H, W = decomposition.shape
    assert C == 3, "SmoothLoss repeats its 3x3 filter over 3 image channels"
    LR = L * R

    # Reshape only (no pad, no broadcast, no wrapper-side upcast) -> 1x HBM read.
    img = decomposition.reshape(N, LR, C, H, W)
    if img.dtype not in (jnp.float32, jnp.bfloat16):
        img = img.astype(jnp.float32)
    d = disp.reshape(N, H, W).astype(jnp.float32)
    dgrads = _disp_grad_mags(d)                            # (N, 2, H, W) f32

    # ---- generation-aware, layout-padded VMEM sizing -------------------------
    try:
        vmem_cap = int(pltpu.get_tpu_info().vmem_capacity_bytes)
    except Exception:
        vmem_cap = 64 << 20                                # v7x per-core floor
    if vmem_limit_bytes is None:
        vmem_limit_bytes = min((vmem_cap * 3) // 4, 64 << 20)
    vmem_limit_bytes = int(vmem_limit_bytes)

    isz = img.dtype.itemsize
    Wp = _round_up(W, 128)                                 # lane padding
    Hp_img = _round_up(H, (8 * 4) // isz)                  # sublanes: 8 (f32) / 16 (bf16)
    Hp32 = _round_up(H, 8)
    img_slice = C * Hp_img * Wp * isz                      # one padded (C,H,W) slice
    temps = 10                                             # peak live f32 slabs per slice
    per_bb = 2 * img_slice + temps * Hp32 * Wp * 4         # 2x-buffered img + temporaries
    fixed = 2 * (2 * Hp32 * Wp * 4) + 2 * (8 * Wp * 4) + (2 << 20)

    if block_lr is None:
        bb_budget = max(1, (vmem_limit_bytes - fixed) // per_bb)
        bb_cap = max(1, (8 << 20) // img_slice)            # <= ~8 MiB per img buffer
        target_nj = max(1, -(-8 // N))                     # aim for >= 8 grid steps total
        bb_steps = max(1, -(-LR // target_nj))
        bb = max(1, min(LR, bb_budget, bb_cap, bb_steps))
        # Prefer a nearby divisor of LR: no masked tail, even per-core work (v7x).
        for cand in range(bb, max(1, bb // 2) - 1, -1):
            if LR % cand == 0:
                bb = cand
                break
    else:
        bb = max(1, min(LR, int(block_lr)))
    nj = -(-LR // bb)
    masked = (nj * bb != LR)
    # TODO(synk): if a single (C,H,W) slice exceeds the VMEM budget (very large
    # H*W), add an H-tiling grid axis with a 1-row halo.
    # TODO(synk): if production W << 128 while H is large, transpose H/W in the
    # wrapper (and swap shift axes) for lane-dense vregs.

    def run(use_roll_flag):
        return pl.pallas_call(
            functools.partial(_smooth_kernel, bb=bb, LR=LR, masked=masked,
                              use_roll=use_roll_flag),
            out_shape=jax.ShapeDtypeStruct((N, nj, 4, W), jnp.float32),
            grid_spec=pltpu.PrefetchScalarGridSpec(
                num_scalar_prefetch=0,
                grid=(N, nj),
                in_specs=[
                    # |grad disp|: index depends only on n -> VMEM-resident
                    # across all nj inner steps (DMA'd once per image).
                    pl.BlockSpec((None, 2, H, W), lambda n, j: (n, 0, 0, 0)),
                    pl.BlockSpec((None, bb, C, H, W), lambda n, j: (n, j, 0, 0, 0)),
                ],
                out_specs=pl.BlockSpec((None, None, 4, W), lambda n, j: (n, j, 0, 0)),
            ),
            compiler_params=pltpu.CompilerParams(
                dimension_semantics=("parallel", "parallel"),
                vmem_limit_bytes=vmem_limit_bytes,
            ),
        )(dgrads, img)

    if use_roll is None:
        # Auto mode (eager call path): try the roll/XLU kernel, fall back to the
        # concatenate-shift kernel if pltpu.roll does not lower on this
        # generation / shape.  Pass use_roll explicitly when calling under jit.
        try:
            partials = jax.block_until_ready(run(True))
        except Exception:
            partials = run(False)
    else:
        partials = run(bool(use_roll))

    # Final tiny combine (4 * N * nj * W numbers) in plain JAX.
    # TODO(synk): for very large N*L*R*H*W the one-pass f32 variance can lose
    # precision; a per-block Chan/Welford combine would be more robust.
    sums = jnp.sum(partials, axis=(0, 1, 3))               # [S_gx, S_gx2, S_gy, S_gy2]
    n = float(N * LR * H * W)

    def _loss(s1, s2):
        mean = s1 / n
        var = jnp.maximum(s2 - s1 * s1 / n, 0.0) / (n - 1.0)   # torch.var: unbiased
        return 10.0 * jnp.sqrt(var + 0.15 * mean * mean)

    return _loss(sums[0], sums[1]) + _loss(sums[2], sums[3])


def _reference(decomposition, disp):
    """Pure-JAX reference mirroring the PyTorch math (direct 9-tap convs)."""
    N, L, R, C, H, W = decomposition.shape
    B = N * L * R
    img = decomposition.reshape(B, C, H, W).astype(jnp.float32)
    d = jnp.broadcast_to(disp.reshape(N, 1, H, W), (N, L * R, H, W)).reshape(B, H, W)

    def conv(x, K):
        xp = jnp.pad(x, ((0, 0), (1, 1), (1, 1)))
        out = jnp.zeros_like(x)
        for di in range(3):
            for dj in range(3):
                out = out + K[di][dj] * xp[:, di:di + H, dj:dj + W]
        return out

    s = img.sum(axis=1)
    gx = jnp.abs(conv(d, KX)) * jnp.exp(-jnp.abs(conv(s, KX)))
    gy = jnp.abs(conv(d, KY)) * jnp.exp(-jnp.abs(conv(s, KY)))

    def loss(g):
        mean = jnp.mean(g)
        var = jnp.var(g, ddof=1)
        return 10.0 * jnp.sqrt(var + 0.15 * mean * mean)

    return loss(gx) + loss(gy)


if __name__ == "__main__":
    key = jax.random.PRNGKey(0)
    k1, k2, k3, k4 = jax.random.split(key, 4)

    # Test 1: the module's natural small shapes (f32).
    N, L, R, C, H, W = 2, 2, 2, 3, 16, 16
    decomposition = jax.random.normal(k1, (N, L, R, C, H, W), dtype=jnp.float32)
    disp = jax.random.uniform(k2, (N, 1, H, W), dtype=jnp.float32)
    out = jax.block_until_ready(smooth_loss(decomposition, disp))
    ref = jax.block_until_ready(_reference(decomposition, disp))
    assert np.allclose(np.asarray(out), np.asarray(ref), rtol=1e-4, atol=1e-4), (out, ref)

    # Test 2: N == 1 with multiple inner-grid steps -> resident |grad disp|
    # block across the L*R axis.
    decomposition2 = jax.random.normal(k3, (1, 4, 1, C, H, W), dtype=jnp.float32)
    disp2 = jax.random.uniform(k4, (1, 1, H, W), dtype=jnp.float32)
    out2 = jax.block_until_ready(smooth_loss(decomposition2, disp2))
    ref2 = jax.block_until_ready(_reference(decomposition2, disp2))
    assert np.allclose(np.asarray(out2), np.asarray(ref2), rtol=1e-4, atol=1e-4), (out2, ref2)

    # Test 3: L*R not divisible by the block -> exercises the masked tail path.
    k5, k6 = jax.random.split(k3)
    decomposition3 = jax.random.normal(k5, (1, 3, 1, C, H, W), dtype=jnp.float32)
    disp3 = jax.random.uniform(k6, (1, 1, H, W), dtype=jnp.float32)
    out3 = jax.block_until_ready(smooth_loss(decomposition3, disp3, block_lr=2))
    ref3 = jax.block_until_ready(_reference(decomposition3, disp3))
    assert np.allclose(np.asarray(out3), np.asarray(ref3), rtol=1e-4, atol=1e-4), (out3, ref3)

    # Test 4: bf16 decomposition read natively (no wrapper upcast copy).
    decomposition4 = decomposition.astype(jnp.bfloat16)
    out4 = jax.block_until_ready(smooth_loss(decomposition4, disp))
    ref4 = jax.block_until_ready(_reference(decomposition4.astype(jnp.float32), disp))
    assert np.allclose(np.asarray(out4), np.asarray(ref4), rtol=1e-3, atol=1e-3), (out4, ref4)

    print("KERNEL_OK")
</pallas_src>

<mosaic_0001>
module attributes {stable_mosaic.version = 11 : i64} {
  func.func @_smooth_kernel(%arg0: i32, %arg1: i32, %arg2: memref<1x2x16x16xf32, #tpu.memory_space<vmem>>, %arg3: memref<1x1x3x16x16xf32, #tpu.memory_space<vmem>>, %arg4: memref<1x1x4x16xf32, #tpu.memory_space<vmem>>) attributes {dimension_semantics = [#tpu.dimension_semantics<parallel>, #tpu.dimension_semantics<parallel>], iteration_bounds = array<i64: 2, 4>, scalar_prefetch = 0 : i64, scratch_operands = 0 : i64, tpu.core_type = #tpu.core_type<tc>, window_params = [{transform_indices = @transform_0, window_bounds = array<i64: 1, 2, 16, 16>}, {transform_indices = @transform_1, window_bounds = array<i64: 1, 1, 3, 16, 16>}, {transform_indices = @transform_2, window_bounds = array<i64: 1, 1, 4, 16>}]} {
    %0 = tpu.iota {dimensions = array<i32: 2>} : vector<1x16x16xi32>
    %1 = tpu.iota {dimensions = array<i32: 1>} : vector<1x16x16xi32>
    %c15_i32 = arith.constant 15 : i32
    %2 = vector.broadcast %c15_i32 : i32 to vector<1x16x16xi32>
    %3 = arith.cmpi slt, %0, %2 : vector<1x16x16xi32>
    %c0_i32 = arith.constant 0 : i32
    %4 = vector.broadcast %c0_i32 : i32 to vector<1x16x16xi32>
    %5 = arith.cmpi sgt, %0, %4 : vector<1x16x16xi32>
    %c15_i32_0 = arith.constant 15 : i32
    %6 = vector.broadcast %c15_i32_0 : i32 to vector<1x16x16xi32>
    %7 = arith.cmpi slt, %1, %6 : vector<1x16x16xi32>
    %c0_i32_1 = arith.constant 0 : i32
    %8 = vector.broadcast %c0_i32_1 : i32 to vector<1x16x16xi32>
    %9 = arith.cmpi sgt, %1, %8 : vector<1x16x16xi32>
    %c0 = arith.constant 0 : index
    %c0_2 = arith.constant 0 : index
    %c0_3 = arith.constant 0 : index
    %c0_4 = arith.constant 0 : index
    %c0_5 = arith.constant 0 : index
    %10 = vector.load %arg3[%c0, %c0_2, %c0_3, %c0_4, %c0_5] : memref<1x1x3x16x16xf32, #tpu.memory_space<vmem>>, vector<1x1x1x16x16xf32>
    %11 = vector.shape_cast %10 : vector<1x1x1x16x16xf32> to vector<1x16x16xf32>
    %c0_6 = arith.constant 0 : index
    %c0_7 = arith.constant 0 : index
    %c1 = arith.constant 1 : index
    %c0_8 = arith.constant 0 : index
    %c0_9 = arith.constant 0 : index
    %12 = vector.load %arg3[%c0_6, %c0_7, %c1, %c0_8, %c0_9] : memref<1x1x3x16x16xf32, #tpu.memory_space<vmem>>, vector<1x1x1x16x16xf32>
    %13 = vector.shape_cast %12 : vector<1x1x1x16x16xf32> to vector<1x16x16xf32>
    %14 = arith.addf %11, %13 : vector<1x16x16xf32>
    %c0_10 = arith.constant 0 : index
    %c0_11 = arith.constant 0 : index
    %c2 = arith.constant 2 : index
    %c0_12 = arith.constant 0 : index
    %c0_13 = arith.constant 0 : index
    %15 = vector.load %arg3[%c0_10, %c0_11, %c2, %c0_12, %c0_13] : memref<1x1x3x16x16xf32, #tpu.memory_space<vmem>>, vector<1x1x1x16x16xf32>
    %16 = vector.shape_cast %15 : vector<1x1x1x16x16xf32> to vector<1x16x16xf32>
    %17 = arith.addf %14, %16 : vector<1x16x16xf32>
    %c1_i32 = arith.constant 1 : i32
    %18 = tpu.dynamic_rotate %17 by %c1_i32 dim 2 : vector<1x16x16xf32>, i32 -> vector<1x16x16xf32>
    %cst = arith.constant 0.000000e+00 : f32
    %19 = vector.broadcast %cst : f32 to vector<1x16x16xf32>
    %20 = arith.select %5, %18, %19 : vector<1x16x16xi1>, vector<1x16x16xf32>
    %c15_i32_14 = arith.constant 15 : i32
    %21 = tpu.dynamic_rotate %17 by %c15_i32_14 dim 2 : vector<1x16x16xf32>, i32 -> vector<1x16x16xf32>
    %cst_15 = arith.constant 0.000000e+00 : f32
    %22 = vector.broadcast %cst_15 : f32 to vector<1x16x16xf32>
    %23 = arith.select %3, %21, %22 : vector<1x16x16xi1>, vector<1x16x16xf32>
    %24 = arith.subf %23, %20 : vector<1x16x16xf32>
    %c1_i32_16 = arith.constant 1 : i32
    %25 = tpu.dynamic_rotate %24 by %c1_i32_16 dim 1 : vector<1x16x16xf32>, i32 -> vector<1x16x16xf32>
    %cst_17 = arith.constant 0.000000e+00 : f32
    %26 = vector.broadcast %cst_17 : f32 to vector<1x16x16xf32>
    %27 = arith.select %9, %25, %26 : vector<1x16x16xi1>, vector<1x16x16xf32>
    %cst_18 = arith.constant 2.000000e+00 : f32
    %28 = vector.broadcast %cst_18 : f32 to vector<1x16x16xf32>
    %29 = arith.mulf %28, %24 : vector<1x16x16xf32>
    %30 = arith.addf %27, %29 : vector<1x16x16xf32>
    %c15_i32_19 = arith.constant 15 : i32
    %31 = tpu.dynamic_rotate %24 by %c15_i32_19 dim 1 : vector<1x16x16xf32>, i32 -> vector<1x16x16xf32>
    %cst_20 = arith.constant 0.000000e+00 : f32
    %32 = vector.broadcast %cst_20 : f32 to vector<1x16x16xf32>
    %33 = arith.select %7, %31, %32 : vector<1x16x16xi1>, vector<1x16x16xf32>
    %34 = arith.addf %30, %33 : vector<1x16x16xf32>
    %c0_21 = arith.constant 0 : index
    %c0_22 = arith.constant 0 : index
    %c0_23 = arith.constant 0 : index
    %c0_24 = arith.constant 0 : index
    %35 = vector.load %arg2[%c0_21, %c0_22, %c0_23, %c0_24] : memref<1x2x16x16xf32, #tpu.memory_space<vmem>>, vector<1x1x16x16xf32>
    %36 = vector.shape_cast %35 : vector<1x1x16x16xf32> to vector<16x16xf32>
    %37 = math.absf %34 : vector<1x16x16xf32>
    %cst_25 = arith.constant 0.000000e+00 : f32
    %38 = vector.broadcast %cst_25 : f32 to vector<1x16x16xf32>
    %39 = arith.subf %38, %37 : vector<1x16x16xf32>
    %40 = math.exp %39 : vector<1x16x16xf32>
    %41 = vector.shape_cast %36 : vector<16x16xf32> to vector<1x16x16xf32>
    %42 = arith.mulf %41, %40 : vector<1x16x16xf32>
    %cst_26 = arith.constant dense<0.000000e+00> : vector<16x16xf32>
    %43 = vector.multi_reduction <add>, %42, %cst_26 [0] : vector<1x16x16xf32> to vector<16x16xf32>
    %cst_27 = arith.constant dense<0.000000e+00> : vector<16xf32>
    %44 = vector.multi_reduction <add>, %43, %cst_27 [0] : vector<16x16xf32> to vector<16xf32>
    %45 = vector.shape_cast %44 : vector<16xf32> to vector<1x16xf32>
    %c0_28 = arith.constant 0 : index
    %c0_29 = arith.constant 0 : index
    %c0_30 = arith.constant 0 : index
    %c0_31 = arith.constant 0 : index
    %46 = vector.load %arg4[%c0_28, %c0_29, %c0_30, %c0_31] : memref<1x1x4x16xf32, #tpu.memory_space<vmem>>, vector<1x1x1x16xf32>
    %47 = vector.shape_cast %46 : vector<1x1x1x16xf32> to vector<1x16xf32>
    %48 = vector.shape_cast %45 : vector<1x16xf32> to vector<1x1x1x16xf32>
    tpu.vector_store %arg4[%c0_28, %c0_29, %c0_30, %c0_31], %48 {strides = array<i32>} : memref<1x1x4x16xf32, #tpu.memory_space<vmem>>, vector<1x1x1x16xf32>,
    %49 = arith.mulf %42, %42 : vector<1x16x16xf32>
    %cst_32 = arith.constant dense<0.000000e+00> : vector<16x16xf32>
    %50 = vector.multi_reduction <add>, %49, %cst_32 [0] : vector<1x16x16xf32> to vector<16x16xf32>
    %cst_33 = arith.constant dense<0.000000e+00> : vector<16xf32>
    %51 = vector.multi_reduction <add>, %50, %cst_33 [0] : vector<16x16xf32> to vector<16xf32>
    %52 = vector.shape_cast %51 : vector<16xf32> to vector<1x16xf32>
    %c0_34 = arith.constant 0 : index
    %c0_35 = arith.constant 0 : index
    %c1_36 = arith.constant 1 : index
    %c0_37 = arith.constant 0 : index
    %53 = vector.load %arg4[%c0_34, %c0_35, %c1_36, %c0_37] : memref<1x1x4x16xf32, #tpu.memory_space<vmem>>, vector<1x1x1x16xf32>
    %54 = vector.shape_cast %53 : vector<1x1x1x16xf32> to vector<1x16xf32>
    %55 = vector.shape_cast %52 : vector<1x16xf32> to vector<1x1x1x16xf32>
    tpu.vector_store %arg4[%c0_34, %c0_35, %c1_36, %c0_37], %55 {strides = array<i32>} : memref<1x1x4x16xf32, #tpu.memory_space<vmem>>, vector<1x1x1x16xf32>,
    %cst_38 = arith.constant 2.000000e+00 : f32
    %56 = vector.broadcast %cst_38 : f32 to vector<1x16x16xf32>
    %57 = arith.mulf %56, %17 : vector<1x16x16xf32>
    %58 = arith.addf %20, %57 : vector<1x16x16xf32>
    %59 = arith.addf %58, %23 : vector<1x16x16xf32>
    %cst_39 = arith.constant 0.000000e+00 : f32
    %60 = vector.broadcast %cst_39 : f32 to vector<1x16x16xf32>
    %61 = arith.subf %60, %59 : vector<1x16x16xf32>
    %62 = arith.addf %20, %23 : vector<1x16x16xf32>
    %c1_i32_40 = arith.constant 1 : i32
    %63 = tpu.dynamic_rotate %61 by %c1_i32_40 dim 1 : vector<1x16x16xf32>, i32 -> vector<1x16x16xf32>
    %cst_41 = arith.constant 0.000000e+00 : f32
    %64 = vector.broadcast %cst_41 : f32 to vector<1x16x16xf32>
    %65 = arith.select %9, %63, %64 : vector<1x16x16xi1>, vector<1x16x16xf32>
    %cst_42 = arith.constant 2.000000e+00 : f32
    %66 = vector.broadcast %cst_42 : f32 to vector<1x16x16xf32>
    %67 = arith.mulf %66, %23 : vector<1x16x16xf32>
    %68 = arith.addf %65, %67 : vector<1x16x16xf32>
    %c15_i32_43 = arith.constant 15 : i32
    %69 = tpu.dynamic_rotate %62 by %c15_i32_43 dim 1 : vector<1x16x16xf32>, i32 -> vector<1x16x16xf32>
    %cst_44 = arith.constant 0.000000e+00 : f32
    %70 = vector.broadcast %cst_44 : f32 to vector<1x16x16xf32>
    %71 = arith.select %7, %69, %70 : vector<1x16x16xi1>, vector<1x16x16xf32>
    %72 = arith.addf %68, %71 : vector<1x16x16xf32>
    %c0_45 = arith.constant 0 : index
    %c1_46 = arith.constant 1 : index
    %c0_47 = arith.constant 0 : index
    %c0_48 = arith.constant 0 : index
    %73 = vector.load %arg2[%c0_45, %c1_46, %c0_47, %c0_48] : memref<1x2x16x16xf32, #tpu.memory_space<vmem>>, vector<1x1x16x16xf32>
    %74 = vector.shape_cast %73 : vector<1x1x16x16xf32> to vector<16x16xf32>
    %75 = math.absf %72 : vector<1x16x16xf32>
    %cst_49 = arith.constant 0.000000e+00 : f32
    %76 = vector.broadcast %cst_49 : f32 to vector<1x16x16xf32>
    %77 = arith.subf %76, %75 : vector<1x16x16xf32>
    %78 = math.exp %77 : vector<1x16x16xf32>
    %79 = vector.shape_cast %74 : vector<16x16xf32> to vector<1x16x16xf32>
    %80 = arith.mulf %79, %78 : vector<1x16x16xf32>
    %cst_50 = arith.constant dense<0.000000e+00> : vector<16x16xf32>
    %81 = vector.multi_reduction <add>, %80, %cst_50 [0] : vector<1x16x16xf32> to vector<16x16xf32>
    %cst_51 = arith.constant dense<0.000000e+00> : vector<16xf32>
    %82 = vector.multi_reduction <add>, %81, %cst_51 [0] : vector<16x16xf32> to vector<16xf32>
    %83 = vector.shape_cast %82 : vector<16xf32> to vector<1x16xf32>
    %c0_52 = arith.constant 0 : index
    %c0_53 = arith.constant 0 : index
    %c2_54 = arith.constant 2 : index
    %c0_55 = arith.constant 0 : index
    %84 = vector.load %arg4[%c0_52, %c0_53, %c2_54, %c0_55] : memref<1x1x4x16xf32, #tpu.memory_space<vmem>>, vector<1x1x1x16xf32>
    %85 = vector.shape_cast %84 : vector<1x1x1x16xf32> to vector<1x16xf32>
    %86 = vector.shape_cast %83 : vector<1x16xf32> to vector<1x1x1x16xf32>
    tpu.vector_store %arg4[%c0_52, %c0_53, %c2_54, %c0_55], %86 {strides = array<i32>} : memref<1x1x4x16xf32, #tpu.memory_space<vmem>>, vector<1x1x1x16xf32>,
    %87 = arith.mulf %80, %80 : vector<1x16x16xf32>
    %cst_56 = arith.constant dense<0.000000e+00> : vector<16x16xf32>
    %88 = vector.multi_reduction <add>, %87, %cst_56 [0] : vector<1x16x16xf32> to vector<16x16xf32>
    %cst_57 = arith.constant dense<0.000000e+00> : vector<16xf32>
    %89 = vector.multi_reduction <add>, %88, %cst_57 [0] : vector<16x16xf32> to vector<16xf32>
    %90 = vector.shape_cast %89 : vector<16xf32> to vector<1x16xf32>
    %c0_58 = arith.constant 0 : index
    %c0_59 = arith.constant 0 : index
    %c3 = arith.constant 3 : index
    %c0_60 = arith.constant 0 : index
    %91 = vector.load %arg4[%c0_58, %c0_59, %c3, %c0_60] : memref<1x1x4x16xf32, #tpu.memory_space<vmem>>, vector<1x1x1x16xf32>
    %92 = vector.shape_cast %91 : vector<1x1x1x16xf32> to vector<1x16xf32>
    %93 = vector.shape_cast %90 : vector<1x16xf32> to vector<1x1x1x16xf32>
    tpu.vector_store %arg4[%c0_58, %c0_59, %c3, %c0_60], %93 {strides = array<i32>} : memref<1x1x4x16xf32, #tpu.memory_space<vmem>>, vector<1x1x1x16xf32>,
    return
  }
  func.func @transform_0(%arg0: i32, %arg1: i32) -> (i32, i32, i32, i32) {
    %c0_i32 = arith.constant 0 : i32
    %c0_i32_0 = arith.constant 0 : i32
    %c0_i32_1 = arith.constant 0 : i32
    %c0_i32_2 = arith.constant 0 : i32
    return %arg0, %c0_i32, %c0_i32_0, %c0_i32_1 : i32, i32, i32, i32
  }
  func.func @transform_1(%arg0: i32, %arg1: i32) -> (i32, i32, i32, i32, i32) {
    %c0_i32 = arith.constant 0 : i32
    %c0_i32_0 = arith.constant 0 : i32
    %c0_i32_1 = arith.constant 0 : i32
    %c0_i32_2 = arith.constant 0 : i32
    return %arg0, %arg1, %c0_i32, %c0_i32_0, %c0_i32_1 : i32, i32, i32, i32, i32
  }
  func.func @transform_2(%arg0: i32, %arg1: i32) -> (i32, i32, i32, i32) {
    %c0_i32 = arith.constant 0 : i32
    %c0_i32_0 = arith.constant 0 : i32
    %c0_i32_1 = arith.constant 0 : i32
    return %arg0, %arg1, %c0_i32, %c0_i32_0 : i32, i32, i32, i32
  }
}

module attributes {stable_mosaic.version = 11 : i64} {
  func.func @_smooth_kernel(%arg0: i32, %arg1: i32, %arg2: memref<1x2x16x16xf32, #tpu.memory_space<vmem>>, %arg3: memref<1x1x3x16x16xf32, #tpu.memory_space<vmem>>, %arg4: memref<1x1x4x16xf32, #tpu.memory_space<vmem>>) attributes {dimension_semantics = [#tpu.dimension_semantics<parallel>, #tpu.dimension_semantics<parallel>], iteration_bounds = array<i64: 2, 4>, scalar_prefetch = 0 : i64, scratch_operands = 0 : i64, tpu.core_type = #tpu.core_type<tc>, window_params = [{transform_indices = @transform_0, window_bounds = array<i64: 1, 2, 16, 16>}, {transform_indices = @transform_1, window_bounds = array<i64: 1, 1, 3, 16, 16>}, {transform_indices = @transform_2, window_bounds = array<i64: 1, 1, 4, 16>}]} {
    %c0 = arith.constant 0 : index
    %c0_0 = arith.constant 0 : index
    %c0_1 = arith.constant 0 : index
    %c0_2 = arith.constant 0 : index
    %c0_3 = arith.constant 0 : index
    %0 = vector.load %arg3[%c0, %c0_0, %c0_1, %c0_2, %c0_3] : memref<1x1x3x16x16xf32, #tpu.memory_space<vmem>>, vector<1x1x1x16x16xf32>
    %1 = vector.shape_cast %0 : vector<1x1x1x16x16xf32> to vector<1x16x16xf32>
    %c0_4 = arith.constant 0 : index
    %c0_5 = arith.constant 0 : index
    %c1 = arith.constant 1 : index
    %c0_6 = arith.constant 0 : index
    %c0_7 = arith.constant 0 : index
    %2 = vector.load %arg3[%c0_4, %c0_5, %c1, %c0_6, %c0_7] : memref<1x1x3x16x16xf32, #tpu.memory_space<vmem>>, vector<1x1x1x16x16xf32>
    %3 = vector.shape_cast %2 : vector<1x1x1x16x16xf32> to vector<1x16x16xf32>
    %4 = arith.addf %1, %3 : vector<1x16x16xf32>
    %c0_8 = arith.constant 0 : index
    %c0_9 = arith.constant 0 : index
    %c2 = arith.constant 2 : index
    %c0_10 = arith.constant 0 : index
    %c0_11 = arith.constant 0 : index
    %5 = vector.load %arg3[%c0_8, %c0_9, %c2, %c0_10, %c0_11] : memref<1x1x3x16x16xf32, #tpu.memory_space<vmem>>, vector<1x1x1x16x16xf32>
    %6 = vector.shape_cast %5 : vector<1x1x1x16x16xf32> to vector<1x16x16xf32>
    %7 = arith.addf %4, %6 : vector<1x16x16xf32>
    %cst = arith.constant 0.000000e+00 : f32
    %8 = vector.broadcast %cst : f32 to vector<1x16x1xf32>
    %9 = vector.extract_strided_slice %7 {offsets = [0, 0, 0], sizes = [1, 16, 15], strides = [1, 1, 1]} : vector<1x16x16xf32> to vector<1x16x15xf32>
    %10 = tpu.concatenate %8, %9 in 2 : vector<1x16x1xf32>, vector<1x16x15xf32> -> vector<1x16x16xf32>
    %cst_12 = arith.constant 0.000000e+00 : f32
    %11 = vector.broadcast %cst_12 : f32 to vector<1x16x1xf32>
    %12 = vector.extract_strided_slice %7 {offsets = [0, 0, 1], sizes = [1, 16, 15], strides = [1, 1, 1]} : vector<1x16x16xf32> to vector<1x16x15xf32>
    %13 = tpu.concatenate %12, %11 in 2 : vector<1x16x15xf32>, vector<1x16x1xf32> -> vector<1x16x16xf32>
    %14 = arith.subf %13, %10 : vector<1x16x16xf32>
    %cst_13 = arith.constant 0.000000e+00 : f32
    %15 = vector.broadcast %cst_13 : f32 to vector<1x1x16xf32>
    %16 = vector.extract_strided_slice %14 {offsets = [0, 0, 0], sizes = [1, 15, 16], strides = [1, 1, 1]} : vector<1x16x16xf32> to vector<1x15x16xf32>
    %17 = tpu.concatenate %15, %16 in 1 : vector<1x1x16xf32>, vector<1x15x16xf32> -> vector<1x16x16xf32>
    %cst_14 = arith.constant 2.000000e+00 : f32
    %18 = vector.broadcast %cst_14 : f32 to vector<1x16x16xf32>
    %19 = arith.mulf %18, %14 : vector<1x16x16xf32>
    %20 = arith.addf %17, %19 : vector<1x16x16xf32>
    %cst_15 = arith.constant 0.000000e+00 : f32
    %21 = vector.broadcast %cst_15 : f32 to vector<1x1x16xf32>
    %22 = vector.extract_strided_slice %14 {offsets = [0, 1, 0], sizes = [1, 15, 16], strides = [1, 1, 1]} : vector<1x16x16xf32> to vector<1x15x16xf32>
    %23 = tpu.concatenate %22, %21 in 1 : vector<1x15x16xf32>, vector<1x1x16xf32> -> vector<1x16x16xf32>
    %24 = arith.addf %20, %23 : vector<1x16x16xf32>
    %c0_16 = arith.constant 0 : index
    %c0_17 = arith.constant 0 : index
    %c0_18 = arith.constant 0 : index
    %c0_19 = arith.constant 0 : index
    %25 = vector.load %arg2[%c0_16, %c0_17, %c0_18, %c0_19] : memref<1x2x16x16xf32, #tpu.memory_space<vmem>>, vector<1x1x16x16xf32>
    %26 = vector.shape_cast %25 : vector<1x1x16x16xf32> to vector<16x16xf32>
    %27 = math.absf %24 : vector<1x16x16xf32>
    %cst_20 = arith.constant 0.000000e+00 : f32
    %28 = vector.broadcast %cst_20 : f32 to vector<1x16x16xf32>
    %29 = arith.subf %28, %27 : vector<1x16x16xf32>
    %30 = math.exp %29 : vector<1x16x16xf32>
    %31 = vector.shape_cast %26 : vector<16x16xf32> to vector<1x16x16xf32>
    %32 = arith.mulf %31, %30 : vector<1x16x16xf32>
    %cst_21 = arith.constant dense<0.000000e+00> : vector<16x16xf32>
    %33 = vector.multi_reduction <add>, %32, %cst_21 [0] : vector<1x16x16xf32> to vector<16x16xf32>
    %cst_22 = arith.constant dense<0.000000e+00> : vector<16xf32>
    %34 = vector.multi_reduction <add>, %33, %cst_22 [0] : vector<16x16xf32> to vector<16xf32>
    %35 = vector.shape_cast %34 : vector<16xf32> to vector<1x16xf32>
    %c0_23 = arith.constant 0 : index
    %c0_24 = arith.constant 0 : index
    %c0_25 = arith.constant 0 : index
    %c0_26 = arith.constant 0 : index
    %36 = vector.load %arg4[%c0_23, %c0_24, %c0_25, %c0_26] : memref<1x1x4x16xf32, #tpu.memory_space<vmem>>, vector<1x1x1x16xf32>
    %37 = vector.shape_cast %36 : vector<1x1x1x16xf32> to vector<1x16xf32>
    %38 = vector.shape_cast %35 : vector<1x16xf32> to vector<1x1x1x16xf32>
    tpu.vector_store %arg4[%c0_23, %c0_24, %c0_25, %c0_26], %38 {strides = array<i32>} : memref<1x1x4x16xf32, #tpu.memory_space<vmem>>, vector<1x1x1x16xf32>,
    %39 = arith.mulf %32, %32 : vector<1x16x16xf32>
    %cst_27 = arith.constant dense<0.000000e+00> : vector<16x16xf32>
    %40 = vector.multi_reduction <add>, %39, %cst_27 [0] : vector<1x16x16xf32> to vector<16x16xf32>
    %cst_28 = arith.constant dense<0.000000e+00> : vector<16xf32>
    %41 = vector.multi_reduction <add>, %40, %cst_28 [0] : vector<16x16xf32> to vector<16xf32>
    %42 = vector.shape_cast %41 : vector<16xf32> to vector<1x16xf32>
    %c0_29 = arith.constant 0 : index
    %c0_30 = arith.constant 0 : index
    %c1_31 = arith.constant 1 : index
    %c0_32 = arith.constant 0 : index
    %43 = vector.load %arg4[%c0_29, %c0_30, %c1_31, %c0_32] : memref<1x1x4x16xf32, #tpu.memory_space<vmem>>, vector<1x1x1x16xf32>
    %44 = vector.shape_cast %43 : vector<1x1x1x16xf32> to vector<1x16xf32>
    %45 = vector.shape_cast %42 : vector<1x16xf32> to vector<1x1x1x16xf32>
    tpu.vector_store %arg4[%c0_29, %c0_30, %c1_31, %c0_32], %45 {strides = array<i32>} : memref<1x1x4x16xf32, #tpu.memory_space<vmem>>, vector<1x1x1x16xf32>,
    %cst_33 = arith.constant 2.000000e+00 : f32
    %46 = vector.broadcast %cst_33 : f32 to vector<1x16x16xf32>
    %47 = arith.mulf %46, %7 : vector<1x16x16xf32>
    %48 = arith.addf %10, %47 : vector<1x16x16xf32>
    %49 = arith.addf %48, %13 : vector<1x16x16xf32>
    %cst_34 = arith.constant 0.000000e+00 : f32
    %50 = vector.broadcast %cst_34 : f32 to vector<1x16x16xf32>
    %51 = arith.subf %50, %49 : vector<1x16x16xf32>
    %52 = arith.addf %10, %13 : vector<1x16x16xf32>
    %cst_35 = arith.constant 0.000000e+00 : f32
    %53 = vector.broadcast %cst_35 : f32 to vector<1x1x16xf32>
    %54 = vector.extract_strided_slice %51 {offsets = [0, 0, 0], sizes = [1, 15, 16], strides = [1, 1, 1]} : vector<1x16x16xf32> to vector<1x15x16xf32>
    %55 = tpu.concatenate %53, %54 in 1 : vector<1x1x16xf32>, vector<1x15x16xf32> -> vector<1x16x16xf32>
    %cst_36 = arith.constant 2.000000e+00 : f32
    %56 = vector.broadcast %cst_36 : f32 to vector<1x16x16xf32>
    %57 = arith.mulf %56, %13 : vector<1x16x16xf32>
    %58 = arith.addf %55, %57 : vector<1x16x16xf32>
    %cst_37 = arith.constant 0.000000e+00 : f32
    %59 = vector.broadcast %cst_37 : f32 to vector<1x1x16xf32>
    %60 = vector.extract_strided_slice %52 {offsets = [0, 1, 0], sizes = [1, 15, 16], strides = [1, 1, 1]} : vector<1x16x16xf32> to vector<1x15x16xf32>
    %61 = tpu.concatenate %60, %59 in 1 : vector<1x15x16xf32>, vector<1x1x16xf32> -> vector<1x16x16xf32>
    %62 = arith.addf %58, %61 : vector<1x16x16xf32>
    %c0_38 = arith.constant 0 : index
    %c1_39 = arith.constant 1 : index
    %c0_40 = arith.constant 0 : index
    %c0_41 = arith.constant 0 : index
    %63 = vector.load %arg2[%c0_38, %c1_39, %c0_40, %c0_41] : memref<1x2x16x16xf32, #tpu.memory_space<vmem>>, vector<1x1x16x16xf32>
    %64 = vector.shape_cast %63 : vector<1x1x16x16xf32> to vector<16x16xf32>
    %65 = math.absf %62 : vector<1x16x16xf32>
    %cst_42 = arith.constant 0.000000e+00 : f32
    %66 = vector.broadcast %cst_42 : f32 to vector<1x16x16xf32>
    %67 = arith.subf %66, %65 : vector<1x16x16xf32>
    %68 = math.exp %67 : vector<1x16x16xf32>
    %69 = vector.shape_cast %64 : vector<16x16xf32> to vector<1x16x16xf32>
    %70 = arith.mulf %69, %68 : vector<1x16x16xf32>
    %cst_43 = arith.constant dense<0.000000e+00> : vector<16x16xf32>
    %71 = vector.multi_reduction <add>, %70, %cst_43 [0] : vector<1x16x16xf32> to vector<16x16xf32>
    %cst_44 = arith.constant dense<0.000000e+00> : vector<16xf32>
    %72 = vector.multi_reduction <add>, %71, %cst_44 [0] : vector<16x16xf32> to vector<16xf32>
    %73 = vector.shape_cast %72 : vector<16xf32> to vector<1x16xf32>
    %c0_45 = arith.constant 0 : index
    %c0_46 = arith.constant 0 : index
    %c2_47 = arith.constant 2 : index
    %c0_48 = arith.constant 0 : index
    %74 = vector.load %arg4[%c0_45, %c0_46, %c2_47, %c0_48] : memref<1x1x4x16xf32, #tpu.memory_space<vmem>>, vector<1x1x1x16xf32>
    %75 = vector.shape_cast %74 : vector<1x1x1x16xf32> to vector<1x16xf32>
    %76 = vector.shape_cast %73 : vector<1x16xf32> to vector<1x1x1x16xf32>
    tpu.vector_store %arg4[%c0_45, %c0_46, %c2_47, %c0_48], %76 {strides = array<i32>} : memref<1x1x4x16xf32, #tpu.memory_space<vmem>>, vector<1x1x1x16xf32>,
    %77 = arith.mulf %70, %70 : vector<1x16x16xf32>
    %cst_49 = arith.constant dense<0.000000e+00> : vector<16x16xf32>
    %78 = vector.multi_reduction <add>, %77, %cst_49 [0] : vector<1x16x16xf32> to vector<16x16xf32>
    %cst_50 = arith.constant dense<0.000000e+00> : vector<16xf32>
    %79 = vector.multi_reduction <add>, %78, %cst_50 [0] : vector<16x16xf32> to vector<16xf32>
    %80 = vector.shape_cast %79 : vector<16xf32> to vector<1x16xf32>
    %c0_51 = arith.constant 0 : index
    %c0_52 = arith.constant 0 : index
    %c3 = arith.constant 3 : index
    %c0_53 = arith.constant 0 : index
    %81 = vector.load %arg4[%c0_51, %c0_52, %c3, %c0_53] : memref<1x1x4x16xf32, #tpu.memory_space<vmem>>, vector<1x1x1x16xf32>
    %82 = vector.shape_cast %81 : vector<1x1x1x16xf32> to vector<1x16xf32>
    %83 = vector.shape_cast %80 : vector<1x16xf32> to vector<1x1x1x16xf32>
    tpu.vector_store %arg4[%c0_51, %c0_52, %c3, %c0_53], %83 {strides = array<i32>} : memref<1x1x4x16xf32, #tpu.memory_space<vmem>>, vector<1x1x1x16xf32>,
    return
  }
  func.func @transform_0(%arg0: i32, %arg1: i32) -> (i32, i32, i32, i32) {
    %c0_i32 = arith.constant 0 : i32
    %c0_i32_0 = arith.constant 0 : i32
    %c0_i32_1 = arith.constant 0 : i32
    %c0_i32_2 = arith.constant 0 : i32
    return %arg0, %c0_i32, %c0_i32_0, %c0_i32_1 : i32, i32, i32, i32
  }
  func.func @transform_1(%arg0: i32, %arg1: i32) -> (i32, i32, i32, i32, i32) {
    %c0_i32 = arith.constant 0 : i32
    %c0_i32_0 = arith.constant 0 : i32
    %c0_i32_1 = arith.constant 0 : i32
    %c0_i32_2 = arith.constant 0 : i32
    return %arg0, %arg1, %c0_i32, %c0_i32_0, %c0_i32_1 : i32, i32, i32, i32, i32
  }
  func.func @transform_2(%arg0: i32, %arg1: i32) -> (i32, i32, i32, i32) {
    %c0_i32 = arith.constant 0 : i32
    %c0_i32_0 = arith.constant 0 : i32
    %c0_i32_1 = arith.constant 0 : i32
    return %arg0, %arg1, %c0_i32, %c0_i32_0 : i32, i32, i32, i32
  }
}

</mosaic_0001>

<llo_original>
// kernel: tpu_custom_call.1
$region0: #{tpu_custom_call.1}
  #allocation0 [shape = 'u32[]', space=smem, size = 0x4, offset = 0x4, fixed_abs, tag = 'smem constant byte address 0x4 - core index']
  #allocation1 [shape = 'u32[144,128]{1,0:T(1,128)}', space=vmem, size = 0x12000, scoped, tag = 'internal scratch']
  %s0 = inlined_call_operand.hbm [shape: f32[2,2,16,16], index: 0, kind: input, shape index: {}]
  %s1 = inlined_call_operand.hbm [shape: f32[2,4,3,16,16], index: 1, kind: input, shape index: {}]
  %s2 = inlined_call_operand.hbm [shape: f32[2,4,4,16], index: 2, kind: output, shape index: {}]
  %s3 = sld [smem:[#allocation0]]
  $region49: #{tpu_custom_call.1} parent=0
    _
  %s5 = ssub.s32 1, %s3
  %s6 = scalar_select 0, %s5, %s3
  $region1: #{tpu_custom_call.1} parent=0
    #allocation2 [shape = 'u8[32768]{0}', space=vmem, size = 0x8000, scoped, tag = 'input window, operand 0']
    #allocation3 [shape = 's32[2]{0}', space=sflag, size = 0x8, scoped, tag = 'scoped memory for tpu_custom_call.1']
    #allocation4 [shape = 's32[2]{0}', space=sflag, size = 0x8, scoped, tag = 'scoped memory for tpu_custom_call.1']
    #allocation5 [shape = 'u8[49152]{0}', space=vmem, size = 0xc000, scoped, tag = 'input window, operand 1']
    #allocation6 [shape = 's32[2]{0}', space=sflag, size = 0x8, scoped, tag = 'scoped memory for tpu_custom_call.1']
    #allocation7 [shape = 'u8[4096]{0}', space=vmem, size = 0x1000, scoped, tag = 'output window, operand 0']
    %7 = vsyncpa [#allocation3], 0
    %s8 = scalar_lea.sflag [#allocation3], 1
    %9 = vsyncpa %s8, 0
    %10 = vsyncpa [#allocation6], 0
    %s11 = scalar_lea.sflag [#allocation6], 1
    %12 = vsyncpa %s11, 0
    %13 = vsyncpa [#allocation4], 0
    %s14 = scalar_lea.sflag [#allocation4], 1
    %15 = vsyncpa %s14, 0
    loop: start=0, step=1, limit=10
    $region2: #{tpu_custom_call.1} parent=1 // loop_pre_header
      _
    $region3: #{tpu_custom_call.1} parent=1 // loop_header
      %s17 = sphi 0, %s21
      %p18 = scmp.ge.s32.totalorder %s17, 10
      %s24 = sphi 0, %s36
      %s25 = sphi 0, %s32
      %s26 = sphi 0, %s24
      %s27 = sphi 0, %s25
      %s28 = sphi 0, %s26
      %s29 = sphi 0, %s27
      %s39 = sphi 0, %s41
      %s42 = sphi 0, %s39
      %s43 = sphi 0, %s42
      %s59 = sphi 0, %s43
      %s67 = sphi 0, %s69
      %s70 = sphi 0, %s67
      %s71 = sphi 0, %s70
      %s87 = sphi 0, %s71
      %s95 = sphi 0, %s97
      %s98 = sphi 0, %s95
      %s99 = sphi 0, %s98
      %s115 = sphi 0, %s99
    $region4: #{tpu_custom_call.1} parent=1 // loop_header_branch
      %20 = sbr.rel (%p18) target = $region8
    $region5: #{tpu_custom_call.1} parent=1 // loop_body
      %s22 = ssub.s32 %s17, 1
      %s23 = ssub.s32 %s17, 2
      %s30 = sadd.s32 1, %s25
      %p31 = scmp.ge.s32.totalorder %s30, 4
      %s32 = scalar_select %p31, 0, %s30
      %s33 = sadd.s32 1, %s24
      %s34 = scalar_select %p31, %s33, %s24
      %p35 = scmp.ge.s32.totalorder %s34, 2
      %s36 = scalar_select %p35, 0, %s34
      %s37 = ssub.s32 %s24, %s36
      %p38 = scmp.eq.s32.totalorder %s37, 0
      %s40 = sadd.s32 %s39, 1
      %s41 = scalar_select %p38, %s39, %s40
      %p44 = pneg %p38
      %p45 = scmp.eq.s32.totalorder %s17, 7
      %p46 = por %p44, %p45
      %p47 = scmp.ne.s32.totalorder %s39, %s42
      %p48 = scmp.eq.s32.totalorder %s17, 0
      %p49 = por %p47, %p48
      %p50 = scmp.ne.s32.totalorder %s39, %s42
      %p51 = scmp.eq.s32.totalorder %s22, 7
      %p52 = por %p50, %p51
      %p53 = scmp.ne.s32.totalorder %s42, %s43
      %p54 = scmp.eq.s32.totalorder %s22, 0
      %p55 = por %p53, %p54
      %p56 = scmp.ne.s32.totalorder %s42, %s43
      %p57 = scmp.eq.s32.totalorder %s23, 7
      %p58 = por %p56, %p57
      %p60 = scmp.ne.s32.totalorder %s43, %s59
      %p61 = scmp.eq.s32.totalorder %s23, 0
      %p62 = por %p60, %p61
      %s63 = ssub.s32 %s24, %s36
      %s64 = ssub.s32 %s25, %s32
      %s65 = sor.u32 %s63, %s64
      %p66 = scmp.eq.s32.totalorder %s65, 0
      %s68 = sadd.s32 %s67, 1
      %s69 = scalar_select %p66, %s67, %s68
      %p72 = pneg %p66
      %p73 = scmp.eq.s32.totalorder %s17, 7
      %p74 = por %p72, %p73
      %p75 = scmp.ne.s32.totalorder %s67, %s70
      %p76 = scmp.eq.s32.totalorder %s17, 0
      %p77 = por %p75, %p76
      %p78 = scmp.ne.s32.totalorder %s67, %s70
      %p79 = scmp.eq.s32.totalorder %s22, 7
      %p80 = por %p78, %p79
      %p81 = scmp.ne.s32.totalorder %s70, %s71
      %p82 = scmp.eq.s32.totalorder %s22, 0
      %p83 = por %p81, %p82
      %p84 = scmp.ne.s32.totalorder %s70, %s71
      %p85 = scmp.eq.s32.totalorder %s23, 7
      %p86 = por %p84, %p85
      %p88 = scmp.ne.s32.totalorder %s71, %s87
      %p89 = scmp.eq.s32.totalorder %s23, 0
      %p90 = por %p88, %p89
      %s91 = ssub.s32 %s24, %s36
      %s92 = ssub.s32 %s25, %s32
      %s93 = sor.u32 %s91, %s92
      %p94 = scmp.eq.s32.totalorder %s93, 0
      %s96 = sadd.s32 %s95, 1
      %s97 = scalar_select %p94, %s95, %s96
      %p100 = pneg %p94
      %p101 = scmp.eq.s32.totalorder %s17, 7
      %p102 = por %p100, %p101
      %p103 = scmp.ne.s32.totalorder %s95, %s98
      %p104 = scmp.eq.s32.totalorder %s17, 0
      %p105 = por %p103, %p104
      %p106 = scmp.ne.s32.totalorder %s95, %s98
      %p107 = scmp.eq.s32.totalorder %s22, 7
      %p108 = por %p106, %p107
      %p109 = scmp.ne.s32.totalorder %s98, %s99
      %p110 = scmp.eq.s32.totalorder %s22, 0
      %p111 = por %p109, %p110
      %p112 = scmp.ne.s32.totalorder %s98, %s99
      %p113 = scmp.eq.s32.totalorder %s23, 7
      %p114 = por %p112, %p113
      %p116 = scmp.ne.s32.totalorder %s99, %s115
      %p117 = scmp.eq.s32.totalorder %s23, 0
      %p118 = por %p116, %p117
      %p119 = scmp.le.s32.totalorder 1, %s17
      %p120 = scmp.lt.s32.totalorder %s17, 9
      %p121 = pnand %p119, %p120
      %p122 = pneg %p121
      // Predicated region
      $region9: #{tpu_custom_call.1} parent=5 // pred_check
        _
      $region10: #{tpu_custom_call.1} parent=5 // pred_check_branch
        %124 = sbr.rel (%p121) target = $region12
      $region11: #{tpu_custom_call.1} parent=5 // pred_region
        %s125 = ssub.s32 %s17, 1
      $region12: #{tpu_custom_call.1} parent=5 // pred_fallthru
        _
      %p126 = scmp.lt.s32.totalorder %s17, 8
      // Predicated region
      $region13: #{tpu_custom_call.1} parent=5 // pred_check
        %p127 = pneg %p126
      $region14: #{tpu_custom_call.1} parent=5 // pred_check_branch
        %129 = sbr.rel (%p127) target = $region16
      $region15: #{tpu_custom_call.1} parent=5 // pred_region
        // Predicated region
        $region17: #{tpu_custom_call.1} parent=15 // pred_check
          %p130 = pneg %p49
        $region18: #{tpu_custom_call.1} parent=15 // pred_check_branch
          %132 = sbr.rel (%p130) target = $region20
        $region19: #{tpu_custom_call.1} parent=15 // pred_region
          %s133 = sand.u32 %s39, 1
          %s134 = scalar_lea.sflag [#allocation3], %s133
          %s135 = sand.u32 %s39, 1
          %s136 = smul.addr %s135, 32
          %s137 = scalar_lea.vmem [#allocation2], %s136
          %s139 = ssub.s32 512, 512
          %140 = vsyncadd %s134, %s139
          %s141 = smul.addr %s24, 4
          %s142 = smul.addr %s141, 128
          %s143 = scalar_lea.hbm %s0, %s142
          %s144 = sshll.u32 %s137, 4
          %s145 = int_to_ptr.vmem [resolvable:$true] %s144
          %150 = dma.hbm_to_vmem [thread:$0]  %s143, 512, %s145, %s134, 128, 128, 8
        $region20: #{tpu_custom_call.1} parent=15 // pred_fallthru
          _
        // Predicated region
        $region21: #{tpu_custom_call.1} parent=15 // pred_check
          %p151 = pneg %p77
        $region22: #{tpu_custom_call.1} parent=15 // pred_check_branch
          %153 = sbr.rel (%p151) target = $region24
        $region23: #{tpu_custom_call.1} parent=15 // pred_region
          %s154 = sand.u32 %s67, 1
          %s155 = scalar_lea.sflag [#allocation6], %s154
          %s156 = sand.u32 %s67, 1
          %s157 = smul.addr %s156, 48
          %s158 = scalar_lea.vmem [#allocation5], %s157
          %s160 = ssub.s32 768, 768
          %161 = vsyncadd %s155, %s160
          %s162 = smul.addr %s25, 6
          %s163 = smul.addr %s24, 24
          %s164 = sadd.s32 %s162, %s163
          %s165 = smul.addr %s164, 128
          %s166 = scalar_lea.hbm %s1, %s165
          %s167 = sshll.u32 %s158, 4
          %s168 = int_to_ptr.vmem [resolvable:$true] %s167
          %173 = dma.hbm_to_vmem [thread:$0]  %s166, 768, %s168, %s155, 128, 128, 8
        $region24: #{tpu_custom_call.1} parent=15 // pred_fallthru
          _
      $region16: #{tpu_custom_call.1} parent=5 // pred_fallthru
        _
      %p174 = scmp.le.s32.totalorder 1, %s17
      %p175 = scmp.lt.s32.totalorder %s17, 9
      %p176 = pnand %p174, %p175
      %p177 = pneg %p176
      // Predicated region
      $region25: #{tpu_custom_call.1} parent=5 // pred_check
        _
      $region26: #{tpu_custom_call.1} parent=5 // pred_check_branch
        %179 = sbr.rel (%p176) target = $region28
      $region27: #{tpu_custom_call.1} parent=5 // pred_region
        %s180 = ssub.s32 %s17, 1
        %s181 = sand.u32 %s42, 1
        %s182 = scalar_lea.sflag [#allocation3], %s181
        %s183 = sand.u32 %s42, 1
        %s184 = smul.addr %s183, 32
        %s185 = scalar_lea.vmem [#allocation2], %s184
        // Predicated region
        $region29: #{tpu_custom_call.1} parent=27 // pred_check
          %p186 = pneg %p55
        $region30: #{tpu_custom_call.1} parent=27 // pred_check_branch
          %188 = sbr.rel (%p186) target = $region32
        $region31: #{tpu_custom_call.1} parent=27 // pred_region
          %189 = dma.done %s182, 512
        $region32: #{tpu_custom_call.1} parent=27 // pred_fallthru
          _
        %s190 = sand.u32 %s70, 1
        %s191 = scalar_lea.sflag [#allocation6], %s190
        %s192 = sand.u32 %s70, 1
        %s193 = smul.addr %s192, 48
        %s194 = scalar_lea.vmem [#allocation5], %s193
        // Predicated region
        $region33: #{tpu_custom_call.1} parent=27 // pred_check
          %p195 = pneg %p83
        $region34: #{tpu_custom_call.1} parent=27 // pred_check_branch
          %197 = sbr.rel (%p195) target = $region36
        $region35: #{tpu_custom_call.1} parent=27 // pred_region
          %198 = dma.done %s191, 768
        $region36: #{tpu_custom_call.1} parent=27 // pred_fallthru
          _
        %s199 = sand.u32 %s42, 1
        %s200 = scalar_lea.sflag [#allocation3], %s199
        %s201 = sand.u32 %s42, 1
        %s202 = smul.addr %s201, 32
        %s203 = scalar_lea.vmem [#allocation2], %s202
        %p204 = pneg %p55
        %p205 = pneg %p52
        %s206 = sand.u32 %s70, 1
        %s207 = scalar_lea.sflag [#allocation6], %s206
        %s208 = sand.u32 %s70, 1
        %s209 = smul.addr %s208, 48
        %s210 = scalar_lea.vmem [#allocation5], %s209
        %p211 = pneg %p83
        %p212 = pneg %p80
        %p213 = pneg %p111
        %p214 = pneg %p108
        %s215 = sand.u32 %s98, 1
        %s216 = scalar_lea.sflag [#allocation4], %s215
        %s217 = sand.u32 %s98, 1
        %s218 = smul.addr %s217, 4
        %s219 = scalar_lea.vmem [#allocation7], %s218
        %v220 = vlaneseq
        %v221 = vand.u32 %v220, 127
        %v222 = vlaneseq
        %v223 = vshrl.u32 %v222, 7
        %v224 = vadd.s32 %v223, 8
        %vm225 = vcmp.lt.s32.totalorder %v221, 15
        %vm226 = vcmp.gt.s32.totalorder %v221, 0
        %vm227 = vcmp.lt.s32.totalorder %v223, 15
        %vm228 = vcmp.lt.s32.totalorder %v224, 15
        %vm229 = vcmp.gt.s32.totalorder %v223, 0
        %vm230 = vcmp.gt.s32.totalorder %v224, 0
        %v231 = vld [vmem:[%s194] sm:$0xff]
        %v232 = vld [vmem:[%s194 + $0x8] sm:$0xff]
        %s233 = scalar_lea.vmem %s194, 16 [#allocation5]
        %v234 = vld [vmem:[%s233] sm:$0xff]
        %v235 = vld [vmem:[%s233 + $0x8] sm:$0xff]
        %v236 = vadd.f32 %v231, %v234
        %v237 = vadd.f32 %v232, %v235
        %s238 = scalar_lea.vmem %s194, 32 [#allocation5]
        %v239 = vld [vmem:[%s238] sm:$0xff]
        %v240 = vld [vmem:[%s238 + $0x8] sm:$0xff]
        %v241 = vadd.f32 %v236, %v239
        %v242 = vadd.f32 %v237, %v240
        %vm243 = vcmask 1047680
        %244 = vrot.lane.b32.xlu0 %v241, 16
        %v245 = vpop.permute.xlu0 %244
        %v246 = vsel %vm243, %v245, %v241
        %247 = vrot.lane.b32.xlu0 %v242, 16
        %v248 = vpop.permute.xlu0 %247
        %v249 = vsel %vm243, %v248, %v242
        %250 = vrot.lane.b32.xlu0 %v246, 16
        %v251 = vpop.permute.xlu0 %250
        %252 = vrot.lane.b32.xlu0 %v249, 16
        %v253 = vpop.permute.xlu0 %252
        %v254 = vsel %vm243, %v251, %v241
        %v255 = vsel %vm243, %v253, %v242
        %258 = vrot.lane.b32.xlu0 %v254, 113
        %v259 = vpop.permute.xlu0 %258
        %260 = vrot.lane.b32.xlu0 %v255, 113
        %v261 = vpop.permute.xlu0 %260
        %v264 = vsel %vm226, %v259, 0.0
        %v265 = vsel %vm226, %v261, 0.0
        %266 = vrot.lane.b32.xlu0 %v254, 127
        %v267 = vpop.permute.xlu0 %266
        %268 = vrot.lane.b32.xlu0 %v255, 127
        %v269 = vpop.permute.xlu0 %268
        %v272 = vsel %vm225, %v267, 0.0
        %v273 = vsel %vm225, %v269, 0.0
        %v274 = vsub.f32 %v272, %v264
        %v275 = vsub.f32 %v273, %v265
        %v276 = vrot.slane %v274, 7
        %v277 = vrot.slane %v275, 7
        %vm278 = vcmp.lt.s32.totalorder %v223, 1
        %v279 = vsel %vm278, %v276, %v277
        %v280 = vsel %vm278, %v277, %v276
        %v281 = vsel %vm229, %v280, 0.0
        %v282 = vsel %vm230, %v279, 0.0
        %v283 = vmul.f32 %v274, 2.0
        %v284 = vmul.f32 %v275, 2.0
        %v285 = vadd.f32 %v281, %v283
        %v286 = vadd.f32 %v282, %v284
        %v287 = vrot.slane %v274, 1
        %v288 = vrot.slane %v275, 1
        %vm289 = vcmp.lt.s32.totalorder %v223, 7
        %v290 = vsel %vm289, %v287, %v288
        %v291 = vsel %vm289, %v288, %v287
        %v292 = vsel %vm227, %v290, 0.0
        %v293 = vsel %vm228, %v291, 0.0
        %v294 = vadd.f32 %v285, %v292
        %v295 = vadd.f32 %v286, %v293
        %v296 = vld [vmem:[%s185] sm:$0xff]
        %v297 = vld [vmem:[%s185 + $0x8] sm:$0xff]
        %v298 = vand.u32 2147483647, %v294
        %v299 = vand.u32 2147483647, %v295
        %v300 = vsub.f32 0.0, %v298
        %v301 = vsub.f32 0.0, %v299
        %v302 = vmul.f32 %v300, 1.442695
        %v303 = vpow.pop %v302
        %v304 = vmul.f32 %v301, 1.442695
        %v305 = vpow.pop %v304
        %v306 = vmul.f32 %v296, %v303
        %v307 = vmul.f32 %v297, %v305
        %v308 = vadd.f32 %v306, 0.0
        %v309 = vadd.f32 %v307, 0.0
        %vm310 = vcmask 130048
        %v311 = vsel %vm310, %v308, 0.0
        %v312 = vsel %vm310, %v309, 0.0
        %v313 = vadd.f32 %v311, %v312
        %v314 = vrot.slane %v313, 4
        %v315 = vadd.f32 %v313, %v314
        %v316 = vrot.slane %v315, 2
        %v317 = vadd.f32 %v315, %v316
        %v318 = vrot.slane %v317, 1
        %v319 = vadd.f32 %v317, %v318
        %vm320 = vcmask 122880
        %321 = vst.msk [vmem:[%s219] sm:$0x1] %vm320, %v319
        %v322 = vmul.f32 %v306, %v306
        %v323 = vmul.f32 %v307, %v307
        %v324 = vadd.f32 %v322, 0.0
        %v325 = vadd.f32 %v323, 0.0
        %v326 = vsel %vm310, %v324, 0.0
        %v327 = vsel %vm310, %v325, 0.0
        %v328 = vadd.f32 %v326, %v327
        %v329 = vrot.slane %v328, 4
        %v330 = vadd.f32 %v328, %v329
        %v331 = vrot.slane %v330, 2
        %v332 = vadd.f32 %v330, %v331
        %v333 = vrot.slane %v332, 1
        %v334 = vadd.f32 %v332, %v333
        %335 = vst.msk [vmem:[%s219 + $0x1] sm:$0x1] %vm320, %v334
        %v336 = vmul.f32 %v241, 2.0
        %v337 = vmul.f32 %v242, 2.0
        %v338 = vadd.f32 %v264, %v336
        %v339 = vadd.f32 %v265, %v337
        %v340 = vadd.f32 %v338, %v272
        %v341 = vadd.f32 %v339, %v273
        %v342 = vsub.f32 0.0, %v340
        %v343 = vsub.f32 0.0, %v341
        %v344 = vadd.f32 %v264, %v272
        %v345 = vadd.f32 %v265, %v273
        %v346 = vrot.slane %v342, 7
        %v347 = vrot.slane %v343, 7
        %v348 = vsel %vm278, %v346, %v347
        %v349 = vsel %vm278, %v347, %v346
        %v350 = vsel %vm229, %v349, 0.0
        %v351 = vsel %vm230, %v348, 0.0
        %v352 = vmul.f32 %v272, 2.0
        %v353 = vmul.f32 %v273, 2.0
        %v354 = vadd.f32 %v350, %v352
        %v355 = vadd.f32 %v351, %v353
        %v356 = vrot.slane %v344, 1
        %v357 = vrot.slane %v345, 1
        %v358 = vsel %vm289, %v356, %v357
        %v359 = vsel %vm289, %v357, %v356
        %v360 = vsel %vm227, %v358, 0.0
        %v361 = vsel %vm228, %v359, 0.0
        %v362 = vadd.f32 %v354, %v360
        %v363 = vadd.f32 %v355, %v361
        %s364 = scalar_lea.vmem %s185, 16 [#allocation2]
        %v365 = vld [vmem:[%s364] sm:$0xff]
        %v366 = vld [vmem:[%s364 + $0x8] sm:$0xff]
        %v367 = vand.u32 2147483647, %v362
        %v368 = vand.u32 2147483647, %v363
        %v369 = vsub.f32 0.0, %v367
        %v370 = vsub.f32 0.0, %v368
        %v371 = vmul.f32 %v369, 1.442695
        %v372 = vpow.pop %v371
        %v373 = vmul.f32 %v370, 1.442695
        %v374 = vpow.pop %v373
        %v375 = vmul.f32 %v365, %v372
        %v376 = vmul.f32 %v366, %v374
        %v377 = vadd.f32 %v375, 0.0
        %v378 = vadd.f32 %v376, 0.0
        %v379 = vsel %vm310, %v377, 0.0
        %v380 = vsel %vm310, %v378, 0.0
        %v381 = vadd.f32 %v379, %v380
        %v382 = vrot.slane %v381, 4
        %v383 = vadd.f32 %v381, %v382
        %v384 = vrot.slane %v383, 2
        %v385 = vadd.f32 %v383, %v384
        %v386 = vrot.slane %v385, 1
        %v387 = vadd.f32 %v385, %v386
        %388 = vst.msk [vmem:[%s219 + $0x2] sm:$0x1] %vm320, %v387
        %v389 = vmul.f32 %v375, %v375
        %v390 = vmul.f32 %v376, %v376
        %v391 = vadd.f32 %v389, 0.0
        %v392 = vadd.f32 %v390, 0.0
        %v393 = vsel %vm310, %v391, 0.0
        %v394 = vsel %vm310, %v392, 0.0
        %v395 = vadd.f32 %v393, %v394
        %v396 = vrot.slane %v395, 4
        %v397 = vadd.f32 %v395, %v396
        %v398 = vrot.slane %v397, 2
        %v399 = vadd.f32 %v397, %v398
        %v400 = vrot.slane %v399, 1
        %v401 = vadd.f32 %v399, %v400
        %402 = vst.msk [vmem:[%s219 + $0x3] sm:$0x1] %vm320, %v401
        %s403 = sand.u32 %s98, 1
        %s404 = scalar_lea.sflag [#allocation4], %s403
        %s405 = sand.u32 %s98, 1
        %s406 = smul.addr %s405, 4
        %s407 = scalar_lea.vmem [#allocation7], %s406
        // Predicated region
        $region37: #{tpu_custom_call.1} parent=27 // pred_check
          %p408 = pneg %p108
        $region38: #{tpu_custom_call.1} parent=27 // pred_check_branch
          %410 = sbr.rel (%p408) target = $region40
        $region39: #{tpu_custom_call.1} parent=27 // pred_region
          %s412 = ssub.s32 64, 64
          %413 = vsyncadd %s404, %s412
          %s414 = smul.addr %s26, 4
          %s415 = sadd.s32 %s27, %s414
          %s416 = smul.addr %s415, 64
          %s417 = scalar_lea.hbm %s2, %s416
          %s419 = sshll.u32 %s407, 4
          %s420 = int_to_ptr.vmem [resolvable:$true] %s419
          %422 = dma.vmem_to_hbm [thread:$0]  %s420, 64, %s417, %s404
        $region40: #{tpu_custom_call.1} parent=27 // pred_fallthru
          _
      $region28: #{tpu_custom_call.1} parent=5 // pred_fallthru
        _
      %p423 = scmp.le.s32.totalorder 2, %s17
      // Predicated region
      $region41: #{tpu_custom_call.1} parent=5 // pred_check
        %p424 = pneg %p423
      $region42: #{tpu_custom_call.1} parent=5 // pred_check_branch
        %426 = sbr.rel (%p424) target = $region44
      $region43: #{tpu_custom_call.1} parent=5 // pred_region
        %s427 = ssub.s32 %s17, 2
        // Predicated region
        $region45: #{tpu_custom_call.1} parent=43 // pred_check
          %p428 = pneg %p114
        $region46: #{tpu_custom_call.1} parent=43 // pred_check_branch
          %430 = sbr.rel (%p428) target = $region48
        $region47: #{tpu_custom_call.1} parent=43 // pred_region
          %s431 = sand.u32 %s99, 1
          %s432 = scalar_lea.sflag [#allocation4], %s431
          %s433 = sand.u32 %s99, 1
          %s434 = smul.addr %s433, 4
          %s435 = scalar_lea.vmem [#allocation7], %s434
          %436 = dma.done %s432, 64
        $region48: #{tpu_custom_call.1} parent=43 // pred_fallthru
          _
      $region44: #{tpu_custom_call.1} parent=5 // pred_fallthru
        _
    $region6: #{tpu_custom_call.1} parent=1 // loop_footer
      %s21 = sadd.s32 1, %s17
    $region7: #{tpu_custom_call.1} parent=1 // loop_footer_branch
      %16 = sbr.rel target = $region3
    $region8: #{tpu_custom_call.1} parent=1 // loop_exit
      _
    %437 = vsyncpa [#allocation3], 1
    %s438 = scalar_lea.sflag [#allocation3], 1
    %439 = vsyncpa %s438, 1
    %440 = vsyncpa [#allocation6], 1
    %s441 = scalar_lea.sflag [#allocation6], 1
    %442 = vsyncpa %s441, 1
    %443 = vsyncpa [#allocation4], 1
    %s444 = scalar_lea.sflag [#allocation4], 1
    %445 = vsyncpa %s444, 1

// kernel: tpu_custom_call.1
$region0: #{tpu_custom_call.1}
  #allocation0 [shape = 'u32[]', space=smem, size = 0x4, offset = 0x4, fixed_abs, tag = 'smem constant byte address 0x4 - core index']
  #allocation1 [shape = 'u32[144,128]{1,0:T(1,128)}', space=vmem, size = 0x12000, scoped, tag = 'internal scratch']
  %s0 = inlined_call_operand.hbm [shape: f32[2,2,16,16], index: 0, kind: input, shape index: {}]
  %s1 = inlined_call_operand.hbm [shape: f32[2,4,3,16,16], index: 1, kind: input, shape index: {}]
  %s2 = inlined_call_operand.hbm [shape: f32[2,4,4,16], index: 2, kind: output, shape index: {}]
  %s3 = sld [smem:[#allocation0]]
  $region49: #{tpu_custom_call.1} parent=0
    _
  %s5 = ssub.s32 1, %s3
  %s6 = scalar_select 0, %s5, %s3
  $region1: #{tpu_custom_call.1} parent=0
    #allocation2 [shape = 'u8[32768]{0}', space=vmem, size = 0x8000, scoped, tag = 'input window, operand 0']
    #allocation3 [shape = 's32[2]{0}', space=sflag, size = 0x8, scoped, tag = 'scoped memory for tpu_custom_call.1']
    #allocation4 [shape = 's32[2]{0}', space=sflag, size = 0x8, scoped, tag = 'scoped memory for tpu_custom_call.1']
    #allocation5 [shape = 'u8[49152]{0}', space=vmem, size = 0xc000, scoped, tag = 'input window, operand 1']
    #allocation6 [shape = 's32[2]{0}', space=sflag, size = 0x8, scoped, tag = 'scoped memory for tpu_custom_call.1']
    #allocation7 [shape = 'u8[4096]{0}', space=vmem, size = 0x1000, scoped, tag = 'output window, operand 0']
    %7 = vsyncpa [#allocation3], 0
    %s8 = scalar_lea.sflag [#allocation3], 1
    %9 = vsyncpa %s8, 0
    %10 = vsyncpa [#allocation6], 0
    %s11 = scalar_lea.sflag [#allocation6], 1
    %12 = vsyncpa %s11, 0
    %13 = vsyncpa [#allocation4], 0
    %s14 = scalar_lea.sflag [#allocation4], 1
    %15 = vsyncpa %s14, 0
    loop: start=0, step=1, limit=10
    $region2: #{tpu_custom_call.1} parent=1 // loop_pre_header
      _
    $region3: #{tpu_custom_call.1} parent=1 // loop_header
      %s17 = sphi 0, %s21
      %p18 = scmp.ge.s32.totalorder %s17, 10
      %s24 = sphi 0, %s36
      %s25 = sphi 0, %s32
      %s26 = sphi 0, %s24
      %s27 = sphi 0, %s25
      %s28 = sphi 0, %s26
      %s29 = sphi 0, %s27
      %s39 = sphi 0, %s41
      %s42 = sphi 0, %s39
      %s43 = sphi 0, %s42
      %s59 = sphi 0, %s43
      %s67 = sphi 0, %s69
      %s70 = sphi 0, %s67
      %s71 = sphi 0, %s70
      %s87 = sphi 0, %s71
      %s95 = sphi 0, %s97
      %s98 = sphi 0, %s95
      %s99 = sphi 0, %s98
      %s115 = sphi 0, %s99
    $region4: #{tpu_custom_call.1} parent=1 // loop_header_branch
      %20 = sbr.rel (%p18) target = $region8
    $region5: #{tpu_custom_call.1} parent=1 // loop_body
      %s22 = ssub.s32 %s17, 1
      %s23 = ssub.s32 %s17, 2
      %s30 = sadd.s32 1, %s25
      %p31 = scmp.ge.s32.totalorder %s30, 4
      %s32 = scalar_select %p31, 0, %s30
      %s33 = sadd.s32 1, %s24
      %s34 = scalar_select %p31, %s33, %s24
      %p35 = scmp.ge.s32.totalorder %s34, 2
      %s36 = scalar_select %p35, 0, %s34
      %s37 = ssub.s32 %s24, %s36
      %p38 = scmp.eq.s32.totalorder %s37, 0
      %s40 = sadd.s32 %s39, 1
      %s41 = scalar_select %p38, %s39, %s40
      %p44 = pneg %p38
      %p45 = scmp.eq.s32.totalorder %s17, 7
      %p46 = por %p44, %p45
      %p47 = scmp.ne.s32.totalorder %s39, %s42
      %p48 = scmp.eq.s32.totalorder %s17, 0
      %p49 = por %p47, %p48
      %p50 = scmp.ne.s32.totalorder %s39, %s42
      %p51 = scmp.eq.s32.totalorder %s22, 7
      %p52 = por %p50, %p51
      %p53 = scmp.ne.s32.totalorder %s42, %s43
      %p54 = scmp.eq.s32.totalorder %s22, 0
      %p55 = por %p53, %p54
      %p56 = scmp.ne.s32.totalorder %s42, %s43
      %p57 = scmp.eq.s32.totalorder %s23, 7
      %p58 = por %p56, %p57
      %p60 = scmp.ne.s32.totalorder %s43, %s59
      %p61 = scmp.eq.s32.totalorder %s23, 0
      %p62 = por %p60, %p61
      %s63 = ssub.s32 %s24, %s36
      %s64 = ssub.s32 %s25, %s32
      %s65 = sor.u32 %s63, %s64
      %p66 = scmp.eq.s32.totalorder %s65, 0
      %s68 = sadd.s32 %s67, 1
      %s69 = scalar_select %p66, %s67, %s68
      %p72 = pneg %p66
      %p73 = scmp.eq.s32.totalorder %s17, 7
      %p74 = por %p72, %p73
      %p75 = scmp.ne.s32.totalorder %s67, %s70
      %p76 = scmp.eq.s32.totalorder %s17, 0
      %p77 = por %p75, %p76
      %p78 = scmp.ne.s32.totalorder %s67, %s70
      %p79 = scmp.eq.s32.totalorder %s22, 7
      %p80 = por %p78, %p79
      %p81 = scmp.ne.s32.totalorder %s70, %s71
      %p82 = scmp.eq.s32.totalorder %s22, 0
      %p83 = por %p81, %p82
      %p84 = scmp.ne.s32.totalorder %s70, %s71
      %p85 = scmp.eq.s32.totalorder %s23, 7
      %p86 = por %p84, %p85
      %p88 = scmp.ne.s32.totalorder %s71, %s87
      %p89 = scmp.eq.s32.totalorder %s23, 0
      %p90 = por %p88, %p89
      %s91 = ssub.s32 %s24, %s36
      %s92 = ssub.s32 %s25, %s32
      %s93 = sor.u32 %s91, %s92
      %p94 = scmp.eq.s32.totalorder %s93, 0
      %s96 = sadd.s32 %s95, 1
      %s97 = scalar_select %p94, %s95, %s96
      %p100 = pneg %p94
      %p101 = scmp.eq.s32.totalorder %s17, 7
      %p102 = por %p100, %p101
      %p103 = scmp.ne.s32.totalorder %s95, %s98
      %p104 = scmp.eq.s32.totalorder %s17, 0
      %p105 = por %p103, %p104
      %p106 = scmp.ne.s32.totalorder %s95, %s98
      %p107 = scmp.eq.s32.totalorder %s22, 7
      %p108 = por %p106, %p107
      %p109 = scmp.ne.s32.totalorder %s98, %s99
      %p110 = scmp.eq.s32.totalorder %s22, 0
      %p111 = por %p109, %p110
      %p112 = scmp.ne.s32.totalorder %s98, %s99
      %p113 = scmp.eq.s32.totalorder %s23, 7
      %p114 = por %p112, %p113
      %p116 = scmp.ne.s32.totalorder %s99, %s115
      %p117 = scmp.eq.s32.totalorder %s23, 0
      %p118 = por %p116, %p117
      %p119 = scmp.le.s32.totalorder 1, %s17
      %p120 = scmp.lt.s32.totalorder %s17, 9
      %p121 = pnand %p119, %p120
      %p122 = pneg %p121
      // Predicated region
      $region9: #{tpu_custom_call.1} parent=5 // pred_check
        _
      $region10: #{tpu_custom_call.1} parent=5 // pred_check_branch
        %124 = sbr.rel (%p121) target = $region12
      $region11: #{tpu_custom_call.1} parent=5 // pred_region
        %s125 = ssub.s32 %s17, 1
      $region12: #{tpu_custom_call.1} parent=5 // pred_fallthru
        _
      %p126 = scmp.lt.s32.totalorder %s17, 8
      // Predicated region
      $region13: #{tpu_custom_call.1} parent=5 // pred_check
        %p127 = pneg %p126
      $region14: #{tpu_custom_call.1} parent=5 // pred_check_branch
        %129 = sbr.rel (%p127) target = $region16
      $region15: #{tpu_custom_call.1} parent=5 // pred_region
        // Predicated region
        $region17: #{tpu_custom_call.1} parent=15 // pred_check
          %p130 = pneg %p49
        $region18: #{tpu_custom_call.1} parent=15 // pred_check_branch
          %132 = sbr.rel (%p130) target = $region20
        $region19: #{tpu_custom_call.1} parent=15 // pred_region
          %s133 = sand.u32 %s39, 1
          %s134 = scalar_lea.sflag [#allocation3], %s133
          %s135 = sand.u32 %s39, 1
          %s136 = smul.addr %s135, 32
          %s137 = scalar_lea.vmem [#allocation2], %s136
          %s139 = ssub.s32 512, 512
          %140 = vsyncadd %s134, %s139
          %s141 = smul.addr %s24, 4
          %s142 = smul.addr %s141, 128
          %s143 = scalar_lea.hbm %s0, %s142
          %s144 = sshll.u32 %s137, 4
          %s145 = int_to_ptr.vmem [resolvable:$true] %s144
          %150 = dma.hbm_to_vmem [thread:$0]  %s143, 512, %s145, %s134, 128, 128, 8
        $region20: #{tpu_custom_call.1} parent=15 // pred_fallthru
          _
        // Predicated region
        $region21: #{tpu_custom_call.1} parent=15 // pred_check
          %p151 = pneg %p77
        $region22: #{tpu_custom_call.1} parent=15 // pred_check_branch
          %153 = sbr.rel (%p151) target = $region24
        $region23: #{tpu_custom_call.1} parent=15 // pred_region
          %s154 = sand.u32 %s67, 1
          %s155 = scalar_lea.sflag [#allocation6], %s154
          %s156 = sand.u32 %s67, 1
          %s157 = smul.addr %s156, 48
          %s158 = scalar_lea.vmem [#allocation5], %s157
          %s160 = ssub.s32 768, 768
          %161 = vsyncadd %s155, %s160
          %s162 = smul.addr %s25, 6
          %s163 = smul.addr %s24, 24
          %s164 = sadd.s32 %s162, %s163
          %s165 = smul.addr %s164, 128
          %s166 = scalar_lea.hbm %s1, %s165
          %s167 = sshll.u32 %s158, 4
          %s168 = int_to_ptr.vmem [resolvable:$true] %s167
          %173 = dma.hbm_to_vmem [thread:$0]  %s166, 768, %s168, %s155, 128, 128, 8
        $region24: #{tpu_custom_call.1} parent=15 // pred_fallthru
          _
      $region16: #{tpu_custom_call.1} parent=5 // pred_fallthru
        _
      %p174 = scmp.le.s32.totalorder 1, %s17
      %p175 = scmp.lt.s32.totalorder %s17, 9
      %p176 = pnand %p174, %p175
      %p177 = pneg %p176
      // Predicated region
      $region25: #{tpu_custom_call.1} parent=5 // pred_check
        _
      $region26: #{tpu_custom_call.1} parent=5 // pred_check_branch
        %179 = sbr.rel (%p176) target = $region28
      $region27: #{tpu_custom_call.1} parent=5 // pred_region
        %s180 = ssub.s32 %s17, 1
        %s181 = sand.u32 %s42, 1
        %s182 = scalar_lea.sflag [#allocation3], %s181
        %s183 = sand.u32 %s42, 1
        %s184 = smul.addr %s183, 32
        %s185 = scalar_lea.vmem [#allocation2], %s184
        // Predicated region
        $region29: #{tpu_custom_call.1} parent=27 // pred_check
          %p186 = pneg %p55
        $region30: #{tpu_custom_call.1} parent=27 // pred_check_branch
          %188 = sbr.rel (%p186) target = $region32
        $region31: #{tpu_custom_call.1} parent=27 // pred_region
          %189 = dma.done %s182, 512
        $region32: #{tpu_custom_call.1} parent=27 // pred_fallthru
          _
        %s190 = sand.u32 %s70, 1
        %s191 = scalar_lea.sflag [#allocation6], %s190
        %s192 = sand.u32 %s70, 1
        %s193 = smul.addr %s192, 48
        %s194 = scalar_lea.vmem [#allocation5], %s193
        // Predicated region
        $region33: #{tpu_custom_call.1} parent=27 // pred_check
          %p195 = pneg %p83
        $region34: #{tpu_custom_call.1} parent=27 // pred_check_branch
          %197 = sbr.rel (%p195) target = $region36
        $region35: #{tpu_custom_call.1} parent=27 // pred_region
          %198 = dma.done %s191, 768
        $region36: #{tpu_custom_call.1} parent=27 // pred_fallthru
          _
        %s199 = sand.u32 %s42, 1
        %s200 = scalar_lea.sflag [#allocation3], %s199
        %s201 = sand.u32 %s42, 1
        %s202 = smul.addr %s201, 32
        %s203 = scalar_lea.vmem [#allocation2], %s202
        %p204 = pneg %p55
        %p205 = pneg %p52
        %s206 = sand.u32 %s70, 1
        %s207 = scalar_lea.sflag [#allocation6], %s206
        %s208 = sand.u32 %s70, 1
        %s209 = smul.addr %s208, 48
        %s210 = scalar_lea.vmem [#allocation5], %s209
        %p211 = pneg %p83
        %p212 = pneg %p80
        %p213 = pneg %p111
        %p214 = pneg %p108
        %s215 = sand.u32 %s98, 1
        %s216 = scalar_lea.sflag [#allocation4], %s215
        %s217 = sand.u32 %s98, 1
        %s218 = smul.addr %s217, 4
        %s219 = scalar_lea.vmem [#allocation7], %s218
        %v220 = vld [vmem:[%s194] sm:$0xff]
        %v221 = vld [vmem:[%s194 + $0x8] sm:$0xff]
        %s222 = scalar_lea.vmem %s194, 16 [#allocation5]
        %v223 = vld [vmem:[%s222] sm:$0xff]
        %v224 = vld [vmem:[%s222 + $0x8] sm:$0xff]
        %v225 = vadd.f32 %v220, %v223
        %v226 = vadd.f32 %v221, %v224
        %s227 = scalar_lea.vmem %s194, 32 [#allocation5]
        %v228 = vld [vmem:[%s227] sm:$0xff]
        %v229 = vld [vmem:[%s227 + $0x8] sm:$0xff]
        %v230 = vadd.f32 %v225, %v228
        %v231 = vadd.f32 %v226, %v229
        %234 = vrot.lane.b32.xlu0 %v230, 1
        %v235 = vpop.permute.xlu0 %234
        %236 = vrot.lane.b32.xlu0 %v231, 1
        %v237 = vpop.permute.xlu0 %236
        %vm240 = vcmask 7168
        %v241 = vsel %vm240, 0.0, %v235
        %v242 = vsel %vm240, 0.0, %v237
        %243 = vrot.lane.b32.xlu0 %v230, 127
        %v244 = vpop.permute.xlu0 %243
        %245 = vrot.lane.b32.xlu0 %v231, 127
        %v246 = vpop.permute.xlu0 %245
        %vm249 = vcmask 121856
        %v250 = vsel %vm249, %v244, 0.0
        %v251 = vsel %vm249, %v246, 0.0
        %v252 = vsub.f32 %v250, %v241
        %v253 = vsub.f32 %v251, %v242
        %vm256 = vcmask 1040384
        %v257 = vrot.slane %v252, 7
        %v258 = vrot.slane %v253, 7
        %v259 = vsel %vm256, %v257, %v258
        %v262 = vsel %vm256, 0.0, %v257
        %v263 = vmul.f32 %v252, 2.0
        %v264 = vmul.f32 %v253, 2.0
        %v265 = vadd.f32 %v262, %v263
        %v266 = vadd.f32 %v259, %v264
        %vm267 = vcmask 1046528
        %v268 = vrot.slane %v252, 1
        %v269 = vrot.slane %v253, 1
        %v270 = vsel %vm267, %v268, %v269
        %v273 = vsel %vm267, %v269, 0.0
        %v274 = vadd.f32 %v265, %v270
        %v275 = vadd.f32 %v266, %v273
        %v276 = vld [vmem:[%s185] sm:$0xff]
        %v277 = vld [vmem:[%s185 + $0x8] sm:$0xff]
        %v278 = vand.u32 2147483647, %v274
        %v279 = vand.u32 2147483647, %v275
        %v280 = vsub.f32 0.0, %v278
        %v281 = vsub.f32 0.0, %v279
        %v282 = vmul.f32 %v280, 1.442695
        %v283 = vpow.pop %v282
        %v284 = vmul.f32 %v281, 1.442695
        %v285 = vpow.pop %v284
        %v286 = vmul.f32 %v276, %v283
        %v287 = vmul.f32 %v277, %v285
        %v288 = vadd.f32 %v286, 0.0
        %v289 = vadd.f32 %v287, 0.0
        %vm290 = vcmask 130048
        %v291 = vsel %vm290, %v288, 0.0
        %v292 = vsel %vm290, %v289, 0.0
        %v293 = vadd.f32 %v291, %v292
        %v294 = vrot.slane %v293, 4
        %v295 = vadd.f32 %v293, %v294
        %v296 = vrot.slane %v295, 2
        %v297 = vadd.f32 %v295, %v296
        %v298 = vrot.slane %v297, 1
        %v299 = vadd.f32 %v297, %v298
        %vm300 = vcmask 122880
        %301 = vst.msk [vmem:[%s219] sm:$0x1] %vm300, %v299
        %v302 = vmul.f32 %v286, %v286
        %v303 = vmul.f32 %v287, %v287
        %v304 = vadd.f32 %v302, 0.0
        %v305 = vadd.f32 %v303, 0.0
        %v306 = vsel %vm290, %v304, 0.0
        %v307 = vsel %vm290, %v305, 0.0
        %v308 = vadd.f32 %v306, %v307
        %v309 = vrot.slane %v308, 4
        %v310 = vadd.f32 %v308, %v309
        %v311 = vrot.slane %v310, 2
        %v312 = vadd.f32 %v310, %v311
        %v313 = vrot.slane %v312, 1
        %v314 = vadd.f32 %v312, %v313
        %315 = vst.msk [vmem:[%s219 + $0x1] sm:$0x1] %vm300, %v314
        %v316 = vmul.f32 %v230, 2.0
        %v317 = vmul.f32 %v231, 2.0
        %v318 = vadd.f32 %v241, %v316
        %v319 = vadd.f32 %v242, %v317
        %v320 = vadd.f32 %v318, %v250
        %v321 = vadd.f32 %v319, %v251
        %v322 = vsub.f32 0.0, %v320
        %v323 = vsub.f32 0.0, %v321
        %v324 = vadd.f32 %v241, %v250
        %v325 = vadd.f32 %v242, %v251
        %v328 = vrot.slane %v322, 7
        %v329 = vrot.slane %v323, 7
        %v330 = vsel %vm256, %v328, %v329
        %v333 = vsel %vm256, 0.0, %v328
        %v334 = vmul.f32 %v250, 2.0
        %v335 = vmul.f32 %v251, 2.0
        %v336 = vadd.f32 %v333, %v334
        %v337 = vadd.f32 %v330, %v335
        %v340 = vrot.slane %v324, 1
        %v341 = vrot.slane %v325, 1
        %v342 = vsel %vm267, %v340, %v341
        %v345 = vsel %vm267, %v341, 0.0
        %v346 = vadd.f32 %v336, %v342
        %v347 = vadd.f32 %v337, %v345
        %s348 = scalar_lea.vmem %s185, 16 [#allocation2]
        %v349 = vld [vmem:[%s348] sm:$0xff]
        %v350 = vld [vmem:[%s348 + $0x8] sm:$0xff]
        %v351 = vand.u32 2147483647, %v346
        %v352 = vand.u32 2147483647, %v347
        %v353 = vsub.f32 0.0, %v351
        %v354 = vsub.f32 0.0, %v352
        %v355 = vmul.f32 %v353, 1.442695
        %v356 = vpow.pop %v355
        %v357 = vmul.f32 %v354, 1.442695
        %v358 = vpow.pop %v357
        %v359 = vmul.f32 %v349, %v356
        %v360 = vmul.f32 %v350, %v358
        %v361 = vadd.f32 %v359, 0.0
        %v362 = vadd.f32 %v360, 0.0
        %v363 = vsel %vm290, %v361, 0.0
        %v364 = vsel %vm290, %v362, 0.0
        %v365 = vadd.f32 %v363, %v364
        %v366 = vrot.slane %v365, 4
        %v367 = vadd.f32 %v365, %v366
        %v368 = vrot.slane %v367, 2
        %v369 = vadd.f32 %v367, %v368
        %v370 = vrot.slane %v369, 1
        %v371 = vadd.f32 %v369, %v370
        %372 = vst.msk [vmem:[%s219 + $0x2] sm:$0x1] %vm300, %v371
        %v373 = vmul.f32 %v359, %v359
        %v374 = vmul.f32 %v360, %v360
        %v375 = vadd.f32 %v373, 0.0
        %v376 = vadd.f32 %v374, 0.0
        %v377 = vsel %vm290, %v375, 0.0
        %v378 = vsel %vm290, %v376, 0.0
        %v379 = vadd.f32 %v377, %v378
        %v380 = vrot.slane %v379, 4
        %v381 = vadd.f32 %v379, %v380
        %v382 = vrot.slane %v381, 2
        %v383 = vadd.f32 %v381, %v382
        %v384 = vrot.slane %v383, 1
        %v385 = vadd.f32 %v383, %v384
        %386 = vst.msk [vmem:[%s219 + $0x3] sm:$0x1] %vm300, %v385
        %s387 = sand.u32 %s98, 1
        %s388 = scalar_lea.sflag [#allocation4], %s387
        %s389 = sand.u32 %s98, 1
        %s390 = smul.addr %s389, 4
        %s391 = scalar_lea.vmem [#allocation7], %s390
        // Predicated region
        $region37: #{tpu_custom_call.1} parent=27 // pred_check
          %p392 = pneg %p108
        $region38: #{tpu_custom_call.1} parent=27 // pred_check_branch
          %394 = sbr.rel (%p392) target = $region40
        $region39: #{tpu_custom_call.1} parent=27 // pred_region
          %s396 = ssub.s32 64, 64
          %397 = vsyncadd %s388, %s396
          %s398 = smul.addr %s26, 4
          %s399 = sadd.s32 %s27, %s398
          %s400 = smul.addr %s399, 64
          %s401 = scalar_lea.hbm %s2, %s400
          %s403 = sshll.u32 %s391, 4
          %s404 = int_to_ptr.vmem [resolvable:$true] %s403
          %406 = dma.vmem_to_hbm [thread:$0]  %s404, 64, %s401, %s388
        $region40: #{tpu_custom_call.1} parent=27 // pred_fallthru
          _
      $region28: #{tpu_custom_call.1} parent=5 // pred_fallthru
        _
      %p407 = scmp.le.s32.totalorder 2, %s17
      // Predicated region
      $region41: #{tpu_custom_call.1} parent=5 // pred_check
        %p408 = pneg %p407
      $region42: #{tpu_custom_call.1} parent=5 // pred_check_branch
        %410 = sbr.rel (%p408) target = $region44
      $region43: #{tpu_custom_call.1} parent=5 // pred_region
        %s411 = ssub.s32 %s17, 2
        // Predicated region
        $region45: #{tpu_custom_call.1} parent=43 // pred_check
          %p412 = pneg %p114
        $region46: #{tpu_custom_call.1} parent=43 // pred_check_branch
          %414 = sbr.rel (%p412) target = $region48
        $region47: #{tpu_custom_call.1} parent=43 // pred_region
          %s415 = sand.u32 %s99, 1
          %s416 = scalar_lea.sflag [#allocation4], %s415
          %s417 = sand.u32 %s99, 1
          %s418 = smul.addr %s417, 4
          %s419 = scalar_lea.vmem [#allocation7], %s418
          %420 = dma.done %s416, 64
        $region48: #{tpu_custom_call.1} parent=43 // pred_fallthru
          _
      $region44: #{tpu_custom_call.1} parent=5 // pred_fallthru
        _
    $region6: #{tpu_custom_call.1} parent=1 // loop_footer
      %s21 = sadd.s32 1, %s17
    $region7: #{tpu_custom_call.1} parent=1 // loop_footer_branch
      %16 = sbr.rel target = $region3
    $region8: #{tpu_custom_call.1} parent=1 // loop_exit
      _
    %421 = vsyncpa [#allocation3], 1
    %s422 = scalar_lea.sflag [#allocation3], 1
    %423 = vsyncpa %s422, 1
    %424 = vsyncpa [#allocation6], 1
    %s425 = scalar_lea.sflag [#allocation6], 1
    %426 = vsyncpa %s425, 1
    %427 = vsyncpa [#allocation4], 1
    %s428 = scalar_lea.sflag [#allocation4], 1
    %429 = vsyncpa %s428, 1

</llo_original>
